<compile_context>
chip_gen: v5e
topology: v5e:2x2
jax: 0.10.0
libtpu: 0.0.40
codegen_flags: <defaults>
</compile_context>

<pallas_src>
import functools

import jax
import jax.numpy as jnp
from jax.experimental import pallas as pl
from jax.experimental.pallas import tpu as pltpu


_TARGET_GRID_STEPS = 8          # aim for >= ~8 grid steps when N allows it
_F32_INTERMEDIATE_TILES = 3     # f32 upcasts of x and y + the exp(x - m) tile
_XLA_FALLBACK_ELEMS = 1 << 17   # N * round_up(C, 128) below this -> plain XLA


def _round_up(a, b):
    return (a + b - 1) // b * b


def _vmem_capacity_bytes():
    """Per-TensorCore VMEM capacity; conservative v7x default if unknown."""
    try:
        cap = int(pltpu.get_tpu_info().vmem_capacity_bytes)
        if cap > 0:
            return cap
    except Exception:
        pass
    return 64 << 20


def _per_row_vmem_bytes(c_pad, itemsize, n_buf):
    # 2 inputs x n_buf pipeline buffers (input dtype, lane-padded to c_pad)
    # plus the in-kernel full-width f32 intermediates.
    return c_pad * (2 * n_buf * itemsize + _F32_INTERMEDIATE_TILES * 4)


def _plan_tiles(n_rows, n_cols, itemsize, budget_bytes, tile_n, n_buf):
    """Pick (tile_n, lane_dense_output, vmem_bytes_needed)."""
    c_pad = _round_up(n_cols, 128)
    col_align = max(8, 32 // itemsize)          # sublane pack of the input dtype
    per_row = _per_row_vmem_bytes(c_pad, itemsize, n_buf)
    max_rows = max(budget_bytes // per_row, 0)
    forced = tile_n is not None

    if forced:                                   # explicit override (test / tuning)
        tile_n = int(min(tile_n, n_rows))
        if tile_n >= n_rows:
            tile_n, lane_out = n_rows, True
        elif tile_n >= 128:
            tile_n, lane_out = (tile_n // 128) * 128, True
        else:
            tile_n, lane_out = max(col_align, (tile_n // col_align) * col_align), False
    elif n_rows <= max_rows:
        tile_n, lane_out = n_rows, True          # full-extent block: always legal
    elif max_rows >= 128:
        tile_n, lane_out = (max_rows // 128) * 128, True
    else:
        # Vocab-scale C: even a 128-row tile would blow the VMEM budget.
        # Shrink the row tile to a multiple of the sublane pack and emit a
        # (N, 1) column output instead of forcing 128 rows (which previously
        # could request > v7x's 64 MiB/TC for 32k-class f32 heads).
        # TODO(synk): for >100k-class heads, tile C with an online-lse
        # accumulator instead of shrinking the row tile further.
        tile_n, lane_out = max(col_align, (max_rows // col_align) * col_align), False

    if not forced and lane_out and n_rows > 128:
        # Never let the grid collapse to 1: aim for ~_TARGET_GRID_STEPS steps
        # so megacore sharding ("parallel" axis) and double buffering stay
        # effective instead of one serial DMA-in -> compute -> DMA-out block.
        cap = max(128, _round_up(pl.cdiv(n_rows, _TARGET_GRID_STEPS), 128))
        tile_n = min(tile_n, cap)
    tile_n = max(min(tile_n, n_rows), 1)

    # Footprint of the chosen tile in the *tiled* layout (rows rounded to the
    # dtype's sublane pack, lanes already rounded to 128 via c_pad).
    need = per_row * _round_up(tile_n, col_align)
    return tile_n, lane_out, need


def _soft_ce_kernel(x_ref, y_ref, loss_ref, *, lane_out):
    """One (tile_n, C) tile of logits + soft targets -> per-row losses.

    Padded tail rows of a partial block may read undefined VMEM and can
    produce inf/NaN in unused lanes; harmless, they are never written back.
    """
    x = x_ref[...].astype(jnp.float32)
    y = y_ref[...].astype(jnp.float32)

    # loss_i = lse(x_i) * sum_j y_ij - sum_j y_ij * x_ij
    m = jnp.max(x, axis=-1, keepdims=True)                               # (tile_n, 1)
    lse = m + jnp.log(jnp.sum(jnp.exp(x - m), axis=-1, keepdims=True))   # (tile_n, 1)
    sum_y = jnp.sum(y, axis=-1, keepdims=True)                           # (tile_n, 1)
    sum_yx = jnp.sum(y * x, axis=-1, keepdims=True)                      # (tile_n, 1)
    loss = lse * sum_y - sum_yx                                          # (tile_n, 1)

    if lane_out:
        # Column -> lane-dense row (XLU transpose; writeback is a full vst).
        loss_ref[...] = jnp.transpose(loss).astype(loss_ref.dtype)       # (1, tile_n)
    else:
        loss_ref[...] = loss.astype(loss_ref.dtype)                      # (tile_n, 1)


def _xla_forward(x, y, reduction):
    xf = x.astype(jnp.float32)
    yf = y.astype(jnp.float32)
    loss = jnp.sum(-yf * jax.nn.log_softmax(xf, axis=-1), axis=-1)
    return jnp.mean(loss) if reduction == "mean" else loss


def soft_target_cross_entropy(x, y, reduction="mean", *, tile_n=None,
                              vmem_budget_bytes=None, input_buffers=2,
                              use_xla_fallback=True):
    """Pallas implementation of SoftTargetCrossEntropy.forward(x, y)."""
    if x.ndim != 2 or x.shape != y.shape:
        raise ValueError("expected x, y of identical shape [N, C]")
    if reduction not in ("mean", "none"):
        raise NotImplementedError(f"unsupported reduction: {reduction!r}")
    N, C = x.shape
    itemsize = max(jnp.dtype(x.dtype).itemsize, jnp.dtype(y.dtype).itemsize)
    c_pad = _round_up(C, 128)

    # Tiny-problem fast path: the Pallas launch + the separate mean op
    # dominate, and with C <= 64 each 128-lane vreg is mostly padding.
    if use_xla_fallback and tile_n is None and N * c_pad <= _XLA_FALLBACK_ELEMS:
        return _xla_forward(x, y, reduction)

    capacity = _vmem_capacity_bytes()
    budget = int(vmem_budget_bytes) if vmem_budget_bytes else capacity // 2
    n_buf = max(2, int(input_buffers))
    tile_n, lane_out, need = _plan_tiles(N, C, itemsize, budget, tile_n, n_buf)
    grid = (pl.cdiv(N, tile_n),)

    # Input pipeline buffers + f32 intermediates + (tiny) output buffers
    # + headroom for constants/spill; never above the physical per-TC VMEM,
    # and no flat 64 MiB clamp on v5e/v6e's 128 MiB parts.
    vmem_limit = need + 4 * _round_up(tile_n, 128) * 4 + (8 << 20)
    vmem_limit = int(max(min(vmem_limit, capacity - (4 << 20)), 16 << 20))

    spec_kwargs = {}
    if n_buf != 2:
        # Profile-guided deep-pipelining knob (review item); default stays 2.
        spec_kwargs["pipeline_mode"] = pl.Buffered(n_buf)

    def _in_spec():
        return pl.BlockSpec((tile_n, C), lambda i: (i, 0), **spec_kwargs)

    if lane_out:
        out_shape = jax.ShapeDtypeStruct((1, N), jnp.float32)
        out_spec = pl.BlockSpec((1, tile_n), lambda i: (0, i))
    else:
        out_shape = jax.ShapeDtypeStruct((N, 1), jnp.float32)
        out_spec = pl.BlockSpec((tile_n, 1), lambda i: (i, 0))

    out = pl.pallas_call(
        functools.partial(_soft_ce_kernel, lane_out=lane_out),
        out_shape=out_shape,
        grid_spec=pltpu.PrefetchScalarGridSpec(
            num_scalar_prefetch=0,
            grid=grid,
            in_specs=[_in_spec(), _in_spec()],
            out_specs=out_spec,
        ),
        compiler_params=pltpu.CompilerParams(
            dimension_semantics=("parallel",),
            vmem_limit_bytes=vmem_limit,
        ),
    )(x, y)

    row_losses = out[0] if lane_out else out[:, 0]        # (N,) f32
    if reduction == "none":
        return row_losses
    # 'mean': tiny (N,) reduction outside the kernel keeps the grid fully
    # parallel (both v7x TensorCores share the HBM-bound pass).
    return jnp.mean(row_losses)


def _reference(x, y, reduction="mean"):
    xf = x.astype(jnp.float32)
    yf = y.astype(jnp.float32)
    loss = jnp.sum(-yf * jax.nn.log_softmax(xf, axis=-1), axis=-1)
    return jnp.mean(loss) if reduction == "mean" else loss


if __name__ == "__main__":
    key = jax.random.PRNGKey(0)
    keys = jax.random.split(key, 10)

    def check(x, y, atol=1e-4, rtol=1e-4, **kw):
        got_m = jax.block_until_ready(soft_target_cross_entropy(x, y, "mean", **kw))
        got_n = jax.block_until_ready(soft_target_cross_entropy(x, y, "none", **kw))
        assert jnp.allclose(got_m, _reference(x, y, "mean"), atol=atol, rtol=rtol)
        assert jnp.allclose(got_n, _reference(x, y, "none"), atol=atol, rtol=rtol)

    # 1) Tiny MixUp-style case (batch=8, 32 classes): XLA fast path, then the
    #    same case forced through Pallas (single full-extent block).
    x1 = jax.random.normal(keys[0], (8, 32), dtype=jnp.float32)
    y1 = jax.nn.softmax(jax.random.normal(keys[1], (8, 32), dtype=jnp.float32), axis=-1)
    check(x1, y1)
    check(x1, y1, use_xla_fallback=False)

    # 2) Multi-tile lane-dense path: ragged N, C not a multiple of 128.
    x2 = jax.random.normal(keys[2], (300, 160), dtype=jnp.float32)
    y2 = jax.nn.softmax(jax.random.normal(keys[3], (300, 160), dtype=jnp.float32), axis=-1)
    check(x2, y2, tile_n=128)

    # 3) Auto-tiled path: the grid-steps cap keeps grid >= 4 (megacore).
    x3 = jax.random.normal(keys[4], (512, 400), dtype=jnp.float32)
    y3 = jax.nn.softmax(jax.random.normal(keys[5], (512, 400), dtype=jnp.float32), axis=-1)
    check(x3, y3)

    # 4) Large-C style fallback: small row tile + (N, 1) column output.
    x4 = jax.random.normal(keys[6], (64, 2048), dtype=jnp.float32)
    y4 = jax.nn.softmax(jax.random.normal(keys[7], (64, 2048), dtype=jnp.float32), axis=-1)
    check(x4, y4, tile_n=16)

    # 5) bf16 inputs (budget accounts for the in-kernel f32 upcasts).
    x5 = jax.random.normal(keys[8], (384, 400), dtype=jnp.float32).astype(jnp.bfloat16)
    y5 = jax.nn.softmax(jax.random.normal(keys[9], (384, 400), dtype=jnp.float32),
                        axis=-1).astype(jnp.bfloat16)
    check(x5, y5, atol=5e-4, rtol=5e-4)

    print("KERNEL_OK")
</pallas_src>

<mosaic_0001>
module attributes {stable_mosaic.version = 11 : i64} {
  func.func @_soft_ce_kernel(%arg0: i32, %arg1: memref<8x32xf32, #tpu.memory_space<vmem>>, %arg2: memref<8x32xf32, #tpu.memory_space<vmem>>, %arg3: memref<1x8xf32, #tpu.memory_space<vmem>>) attributes {dimension_semantics = [#tpu.dimension_semantics<parallel>], iteration_bounds = array<i64: 1>, scalar_prefetch = 0 : i64, scratch_operands = 0 : i64, tpu.core_type = #tpu.core_type<tc>, window_params = [{transform_indices = @transform_0, window_bounds = array<i64: 8, 32>}, {transform_indices = @transform_1, window_bounds = array<i64: 8, 32>}, {transform_indices = @transform_2, window_bounds = array<i64: 1, 8>}]} {
    %c0 = arith.constant 0 : index
    %c0_0 = arith.constant 0 : index
    %0 = vector.load %arg1[%c0, %c0_0] : memref<8x32xf32, #tpu.memory_space<vmem>>, vector<8x32xf32>
    %c0_1 = arith.constant 0 : index
    %c0_2 = arith.constant 0 : index
    %1 = vector.load %arg2[%c0_1, %c0_2] : memref<8x32xf32, #tpu.memory_space<vmem>>, vector<8x32xf32>
    %cst = arith.constant dense<0xFF800000> : vector<8xf32>
    %2 = vector.multi_reduction <maximumf>, %0, %cst [1] : vector<8x32xf32> to vector<8xf32>
    %3 = vector.shape_cast %2 : vector<8xf32> to vector<8x1xf32>
    %4 = vector.broadcast %3 : vector<8x1xf32> to vector<8x32xf32>
    %5 = arith.subf %0, %4 : vector<8x32xf32>
    %6 = math.exp %5 : vector<8x32xf32>
    %cst_3 = arith.constant dense<0.000000e+00> : vector<8xf32>
    %7 = vector.multi_reduction <add>, %6, %cst_3 [1] : vector<8x32xf32> to vector<8xf32>
    %8 = vector.shape_cast %7 : vector<8xf32> to vector<8x1xf32>
    %9 = math.log %8 : vector<8x1xf32>
    %10 = arith.addf %3, %9 : vector<8x1xf32>
    %cst_4 = arith.constant dense<0.000000e+00> : vector<8xf32>
    %11 = vector.multi_reduction <add>, %1, %cst_4 [1] : vector<8x32xf32> to vector<8xf32>
    %12 = vector.shape_cast %11 : vector<8xf32> to vector<8x1xf32>
    %13 = arith.mulf %1, %0 : vector<8x32xf32>
    %cst_5 = arith.constant dense<0.000000e+00> : vector<8xf32>
    %14 = vector.multi_reduction <add>, %13, %cst_5 [1] : vector<8x32xf32> to vector<8xf32>
    %15 = vector.shape_cast %14 : vector<8xf32> to vector<8x1xf32>
    %16 = arith.mulf %10, %12 : vector<8x1xf32>
    %17 = arith.subf %16, %15 : vector<8x1xf32>
    %18 = tpu.transpose %17, [1, 0] : vector<8x1xf32> -> vector<1x8xf32>
    %c0_6 = arith.constant 0 : index
    %c0_7 = arith.constant 0 : index
    %19 = vector.load %arg3[%c0_6, %c0_7] : memref<1x8xf32, #tpu.memory_space<vmem>>, vector<1x8xf32>
    tpu.vector_store %arg3[%c0_6, %c0_7], %18 {strides = array<i32>} : memref<1x8xf32, #tpu.memory_space<vmem>>, vector<1x8xf32>,
    return
  }
  func.func @transform_0(%arg0: i32) -> (i32, i32) {
    %c0_i32 = arith.constant 0 : i32
    %c0_i32_0 = arith.constant 0 : i32
    return %arg0, %c0_i32 : i32, i32
  }
  func.func @transform_1(%arg0: i32) -> (i32, i32) {
    %c0_i32 = arith.constant 0 : i32
    %c0_i32_0 = arith.constant 0 : i32
    return %arg0, %c0_i32 : i32, i32
  }
  func.func @transform_2(%arg0: i32) -> (i32, i32) {
    %c0_i32 = arith.constant 0 : i32
    %c0_i32_0 = arith.constant 0 : i32
    return %c0_i32, %arg0 : i32, i32
  }
}

</mosaic_0001>

<llo_original>
// kernel: tpu_custom_call.1
$region0: #{tpu_custom_call.1}
  #allocation0 [shape = 'u32[]', space=smem, size = 0x4, offset = 0x4, fixed_abs, tag = 'smem constant byte address 0x4 - core index']
  #allocation1 [shape = 'u32[72,128]{1,0:T(1,128)}', space=vmem, size = 0x9000, scoped, tag = 'internal scratch']
  %s0 = inlined_call_operand.hbm [shape: f32[8,32], index: 0, kind: input, shape index: {}]
  %s1 = inlined_call_operand.hbm [shape: f32[8,32], index: 1, kind: input, shape index: {}]
  %s2 = inlined_call_operand.hbm [shape: f32[1,8], index: 2, kind: output, shape index: {}]
  %s3 = sld [smem:[#allocation0]]
  $region26: #{tpu_custom_call.1} parent=0
    _
  %s5 = ssub.s32 1, %s3
  %s6 = scalar_select 0, %s5, %s3
  $region1: #{tpu_custom_call.1} parent=0
    #allocation2 [shape = 'u8[4096]{0}', space=vmem, size = 0x1000, scoped, tag = 'input window, operand 0, single buffered']
    #allocation3 [shape = 's32[1]{0}', space=sflag, size = 0x4, scoped, tag = 'scoped memory for tpu_custom_call.1']
    #allocation4 [shape = 's32[1]{0}', space=sflag, size = 0x4, scoped, tag = 'scoped memory for tpu_custom_call.1']
    #allocation5 [shape = 'u8[4096]{0}', space=vmem, size = 0x1000, scoped, tag = 'input window, operand 1, single buffered']
    #allocation6 [shape = 's32[1]{0}', space=sflag, size = 0x4, scoped, tag = 'scoped memory for tpu_custom_call.1']
    #allocation7 [shape = 'u8[512]{0}', space=vmem, size = 0x400, scoped, tag = 'output window, operand 0, single buffered']
    %7 = vsyncpa [#allocation3], 0
    %8 = vsyncpa [#allocation6], 0
    %9 = vsyncpa [#allocation4], 0
    // Predicated region
    $region2: #{tpu_custom_call.1} parent=1 // pred_check
      _
    $region3: #{tpu_custom_call.1} parent=1 // pred_check_branch
      %11 = sbr.rel (0) target = $region5
    $region4: #{tpu_custom_call.1} parent=1 // pred_region
      %13 = vsyncadd [#allocation3], 0
      %s15 = sshll.u32 %s0, 4
      %s16 = int_to_ptr.hbm [resolvable:$true] %s15
      %s17 = sshll.u32 [#allocation2], 4
      %s18 = int_to_ptr.vmem [resolvable:$true] %s17
      %20 = dma.hbm_to_vmem [thread:$0]  %s16, 128, %s18, [#allocation3]
    $region5: #{tpu_custom_call.1} parent=1 // pred_fallthru
      _
    // Predicated region
    $region6: #{tpu_custom_call.1} parent=1 // pred_check
      _
    $region7: #{tpu_custom_call.1} parent=1 // pred_check_branch
      %22 = sbr.rel (0) target = $region9
    $region8: #{tpu_custom_call.1} parent=1 // pred_region
      %24 = vsyncadd [#allocation6], 0
      %s26 = sshll.u32 %s1, 4
      %s27 = int_to_ptr.hbm [resolvable:$true] %s26
      %s28 = sshll.u32 [#allocation5], 4
      %s29 = int_to_ptr.vmem [resolvable:$true] %s28
      %31 = dma.hbm_to_vmem [thread:$0]  %s27, 128, %s29, [#allocation6]
    $region9: #{tpu_custom_call.1} parent=1 // pred_fallthru
      _
    // Predicated region
    $region10: #{tpu_custom_call.1} parent=1 // pred_check
      _
    $region11: #{tpu_custom_call.1} parent=1 // pred_check_branch
      %33 = sbr.rel (0) target = $region13
    $region12: #{tpu_custom_call.1} parent=1 // pred_region
      %35 = dma.done [#allocation3], 128
    $region13: #{tpu_custom_call.1} parent=1 // pred_fallthru
      _
    // Predicated region
    $region14: #{tpu_custom_call.1} parent=1 // pred_check
      _
    $region15: #{tpu_custom_call.1} parent=1 // pred_check_branch
      %37 = sbr.rel (0) target = $region17
    $region16: #{tpu_custom_call.1} parent=1 // pred_region
      %39 = dma.done [#allocation6], 128
    $region17: #{tpu_custom_call.1} parent=1 // pred_fallthru
      _
    %v40 = vld [vmem:[#allocation2] sm:$0xff]
    %v41 = vld [vmem:[#allocation5] sm:$0xff]
    %vm42 = vcmask 261120
    %v43 = vsel %vm42, %v40, -inf
    %44 = vmax.xlane.f32.xlu0 %v43
    %v45 = vpop.xlane.xlu0 %44
    %v46 = vsub.f32 %v40, %v45
    %v47 = vmul.f32 %v46, 1.442695
    %v48 = vpow.pop %v47
    %v49 = vsel %vm42, %v48, 0.0
    %50 = vadd.xlane.f32.xlu0 %v49
    %v51 = vpop.xlane.xlu0 %50
    %v52 = vlog2.pop %v51
    %v53 = vmul.f32 %v52, 0.6931472
    %v54 = vadd.f32 %v45, %v53
    %v55 = vsel %vm42, %v41, 0.0
    %56 = vadd.xlane.f32.xlu0 %v55
    %v57 = vpop.xlane.xlu0 %56
    %v58 = vmul.f32 %v41, %v40
    %v59 = vsel %vm42, %v58, 0.0
    %60 = vadd.xlane.f32.xlu0 %v59
    %v61 = vpop.xlane.xlu0 %60
    %v62 = vmul.f32 %v54, %v57
    %v63 = vsub.f32 %v62, %v61
    %64 = vxpose.xlu0.b32.start [1/16] %v63, 128
    %65 = vxpose.xlu0.b32.cont [2/16] 0.0, 128
    %66 = vxpose.xlu0.b32.cont [3/16] 0.0, 128
    %67 = vxpose.xlu0.b32.cont [4/16] 0.0, 128
    %68 = vxpose.xlu0.b32.cont [5/16] 0.0, 128
    %69 = vxpose.xlu0.b32.cont [6/16] 0.0, 128
    %70 = vxpose.xlu0.b32.cont [7/16] 0.0, 128
    %71 = vxpose.xlu0.b32.cont [8/16] 0.0, 128
    %72 = vxpose.xlu0.b32.cont [9/16] 0.0, 128
    %73 = vxpose.xlu0.b32.cont [10/16] 0.0, 128
    %74 = vxpose.xlu0.b32.cont [11/16] 0.0, 128
    %75 = vxpose.xlu0.b32.cont [12/16] 0.0, 128
    %76 = vxpose.xlu0.b32.cont [13/16] 0.0, 128
    %77 = vxpose.xlu0.b32.cont [14/16] 0.0, 128
    %78 = vxpose.xlu0.b32.cont [15/16] 0.0, 128
    %79 = vxpose.xlu0.b32.end [16/16] 0.0, 128
    %v80 = vpop.trf.xlu0
    %v81 = vpop.trf.xlu0
    %v82 = vpop.trf.xlu0
    %v83 = vpop.trf.xlu0
    %v84 = vpop.trf.xlu0
    %v85 = vpop.trf.xlu0
    %v86 = vpop.trf.xlu0
    %v87 = vpop.trf.xlu0
    %v88 = vpop.trf.xlu0
    %v89 = vpop.trf.xlu0
    %v90 = vpop.trf.xlu0
    %v91 = vpop.trf.xlu0
    %v92 = vpop.trf.xlu0
    %v93 = vpop.trf.xlu0
    %v94 = vpop.trf.xlu0
    %v95 = vpop.trf.xlu0
    %vm96 = vcmask 57344
    %97 = vst.msk [vmem:[#allocation7] sm:$0x1] %vm96, %v80
    // Predicated region
    $region18: #{tpu_custom_call.1} parent=1 // pred_check
      _
    $region19: #{tpu_custom_call.1} parent=1 // pred_check_branch
      %99 = sbr.rel (0) target = $region21
    $region20: #{tpu_custom_call.1} parent=1 // pred_region
      %101 = vsyncadd [#allocation4], 0
      %s103 = sshll.u32 [#allocation7], 4
      %s104 = int_to_ptr.vmem [resolvable:$true] %s103
      %s105 = sshll.u32 %s2, 4
      %s106 = int_to_ptr.hbm [resolvable:$true] %s105
      %108 = dma.vmem_to_hbm [thread:$0]  %s104, 16, %s106, [#allocation4]
    $region21: #{tpu_custom_call.1} parent=1 // pred_fallthru
      _
    // Predicated region
    $region22: #{tpu_custom_call.1} parent=1 // pred_check
      _
    $region23: #{tpu_custom_call.1} parent=1 // pred_check_branch
      %110 = sbr.rel (0) target = $region25
    $region24: #{tpu_custom_call.1} parent=1 // pred_region
      %112 = dma.done [#allocation4], 16
    $region25: #{tpu_custom_call.1} parent=1 // pred_fallthru
      _
    %113 = vsyncpa [#allocation3], 1
    %114 = vsyncpa [#allocation6], 1
    %115 = vsyncpa [#allocation4], 1

</llo_original>
